<compile_context>
chip_gen: v7x
topology: tpu7x:2x2x1
jax: 0.10.0
libtpu: 0.0.40
codegen_flags: <defaults>
</compile_context>

<pallas_src>
import functools

import jax
import jax.numpy as jnp
from jax.experimental import pallas as pl
from jax.experimental.pallas import tpu as pltpu


# ----------------------------- Pallas kernel --------------------------------
def _conv_bn_lrelu_kernel(x_ref, b_ref, shift_ref, o_ref, *, z, s, toh):
    # x_ref:     (1, Hp, Wp*Cin)        padded, lane-flattened image (resident per n)
    # b_ref:     (z, Wp*Cin, OW*Cout)   banded BN-folded weights (resident)
    # shift_ref: (1, OW*Cout)           folded bias/BN shift, lane-tiled (resident, f32)
    # o_ref:     (1, TOH, OW*Cout)      lane-dense output tile
    t = pl.program_id(1)
    r0 = t * toh                       # first output row of this tile
    owc = o_ref.shape[-1]

    acc = jnp.zeros((toh, owc), jnp.float32)       # single vreg-sized f32 accumulator
    for ki in range(z):                            # z row-taps; kj and Cin folded into K
        if s == 1:
            slab = x_ref[0, pl.ds(r0 + ki, toh), :]            # (TOH, Wp*Cin)
        else:
            slab = x_ref[0, pl.ds(r0 * s + ki, toh, stride=s), :]
        acc = acc + jnp.dot(slab, b_ref[ki], preferred_element_type=jnp.float32)

    y = acc + shift_ref[...]                       # fused conv-bias + BN shift (f32)
    y = jnp.where(y >= 0.0, y, 0.3 * y)            # LeakyReLU(negative_slope=0.3)
    o_ref[0] = y.astype(o_ref.dtype)


def _pick_toh(oh, ow):
    """Largest multiple-of-8 divisor of OH that still leaves >= 2 OH tiles and keeps a
    tile at <= 1024 output positions; falls back to the whole image (full-dim block)."""
    best = oh
    d = 8
    while d * 2 <= oh:
        if oh % d == 0 and d * ow <= 1024:
            best = d
        d += 8
    return best


# ------------------------------ JAX wrapper ----------------------------------
@functools.partial(jax.jit,
                   static_argnames=("z", "p", "s", "compute_dtype", "out_dtype"))
def conv_block_forward(x, weight, bias, gamma, beta, run_mean, run_var, *,
                       z, p=0, s=1, eps=1e-5,
                       compute_dtype=jnp.float32, out_dtype=None):
    """conv.block1(x): Conv2d(pad p, stride s) -> BatchNorm2d(eval) -> LeakyReLU(0.3).

    bf16 compute_dtype is recommended on all TPU generations (v5e included: its MXU is
    full-rate bf16; the accumulate/epilogue stay f32).  out_dtype defaults to
    compute_dtype; pass jnp.float32 to keep an f32 result with bf16 operands.
    """
    N, Cin, H, W = x.shape
    Cout = weight.shape[0]
    OH = (H + 2 * p - z) // s + 1
    OW = (W + 2 * p - z) // s + 1
    Hp, Wp = H + 2 * p, W + 2 * p
    out_dtype = compute_dtype if out_dtype is None else out_dtype

    # input prep (one tiny XLA pass): NCHW -> NHWC, zero-pad, flatten (W, Cin) onto lanes
    # TODO(synk): fold the zero-pad into the kernel (boundary masks) for large images.
    x_nhwc = jnp.transpose(x, (0, 2, 3, 1))
    xp = jnp.pad(x_nhwc, ((0, 0), (p, p), (p, p), (0, 0))).astype(compute_dtype)
    xp = xp.reshape(N, Hp, Wp * Cin)

    # fold BN(running stats) + conv bias into the weights / a single per-channel shift
    bn_scale = gamma / jnp.sqrt(run_var + eps)                       # (Cout,)
    wk = jnp.transpose(weight, (2, 3, 1, 0)) * bn_scale              # (z, z, Cin, Cout)
    shift = (bias - run_mean) * bn_scale + beta                      # (Cout,)
    shift_t = jnp.tile(shift, OW)[None, :].astype(jnp.float32)       # (1, OW*Cout)

    # banded weights: band[ki, w*Cin+c, ow*Cout+co] = wk[ki, w-ow*s, c, co] in-band else 0.
    # dot(row-slab (TOH, Wp*Cin), band[ki]) contracts kj and Cin in one wide-K matmul.
    w_idx = jnp.arange(Wp)[:, None]
    ow_idx = jnp.arange(OW)[None, :]
    kj = w_idx - ow_idx * s                                          # (Wp, OW)
    valid = (kj >= 0) & (kj < z)
    band = wk[:, jnp.clip(kj, 0, z - 1)]                             # (z, Wp, OW, Cin, Cout)
    band = jnp.where(valid[None, :, :, None, None], band, 0.0)
    band = band.transpose(0, 1, 3, 2, 4).reshape(z, Wp * Cin, OW * Cout)
    band = band.astype(compute_dtype)

    toh = _pick_toh(OH, OW)
    grid = (N, OH // toh)

    kernel = functools.partial(_conv_bn_lrelu_kernel, z=z, s=s, toh=toh)

    out = pl.pallas_call(
        kernel,
        out_shape=jax.ShapeDtypeStruct((N, OH, OW * Cout), out_dtype),
        grid_spec=pltpu.PrefetchScalarGridSpec(
            num_scalar_prefetch=0,
            grid=grid,
            in_specs=[
                # padded image: resident across the OH-tile axis (block index ignores t)
                pl.BlockSpec((1, Hp, Wp * Cin), lambda n, t: (n, 0, 0)),
                # banded weights + shift: resident across the whole grid
                pl.BlockSpec((z, Wp * Cin, OW * Cout), lambda n, t: (0, 0, 0)),
                pl.BlockSpec((1, OW * Cout), lambda n, t: (0, 0)),
            ],
            out_specs=pl.BlockSpec((1, toh, OW * Cout), lambda n, t: (n, t, 0)),
        ),
        compiler_params=pltpu.CompilerParams(
            dimension_semantics=("parallel", "parallel"),  # N and OH tiles -> both TCs
            vmem_limit_bytes=32 * 1024 * 1024,             # explicit budget (v7x guardrail)
        ),
    )(xp, band, shift_t)

    # no lane padding was written; only the final NCHW transpose on real-sized data
    return out.reshape(N, OH, OW, Cout).transpose(0, 3, 1, 2)


# ------------------------------ reference ------------------------------------
def _reference(x, weight, bias, gamma, beta, run_mean, run_var, *, z, p, s, eps=1e-5):
    y = jax.lax.conv_general_dilated(
        x, weight, window_strides=(s, s), padding=[(p, p), (p, p)],
        dimension_numbers=("NCHW", "OIHW", "NCHW"),
        precision=jax.lax.Precision.HIGHEST)
    y = y + bias[None, :, None, None]
    y = (y - run_mean[None, :, None, None]) / jnp.sqrt(run_var[None, :, None, None] + eps)
    y = y * gamma[None, :, None, None] + beta[None, :, None, None]
    return jnp.where(y >= 0, y, 0.3 * y)


if __name__ == "__main__":
    # module config:  conv(x=4, y=8, z=3, p=1, s=1, b=True, g=1)
    N, Cin, H, W = 2, 4, 16, 16
    Cout, Z, P, S = 8, 3, 1, 1

    key = jax.random.PRNGKey(0)
    kx, kw, kb, kg, kbe, km, kv = jax.random.split(key, 7)

    x = jax.random.normal(kx, (N, Cin, H, W), jnp.float32)
    weight = jax.random.normal(kw, (Cout, Cin, Z, Z), jnp.float32) * 0.1
    bias = jax.random.normal(kb, (Cout,), jnp.float32) * 0.1
    gamma = 1.0 + 0.1 * jax.random.normal(kg, (Cout,), jnp.float32)
    beta = 0.1 * jax.random.normal(kbe, (Cout,), jnp.float32)
    run_mean = 0.1 * jax.random.normal(km, (Cout,), jnp.float32)
    run_var = jnp.abs(jax.random.normal(kv, (Cout,), jnp.float32)) + 0.5

    ref = _reference(x, weight, bias, gamma, beta, run_mean, run_var, z=Z, p=P, s=S)

    # f32 operand path: tight correctness check
    out_f32 = conv_block_forward(x, weight, bias, gamma, beta, run_mean, run_var,
                                 z=Z, p=P, s=S, compute_dtype=jnp.float32)
    out_f32 = jax.block_until_ready(out_f32)
    assert out_f32.shape == (N, Cout, H, W), out_f32.shape
    assert jnp.allclose(out_f32, ref, atol=1e-3, rtol=1e-3), \
        float(jnp.abs(out_f32 - ref).max())

    # bf16 operands + bf16 output (recommended on v5e/v6e/v7x): f32 MXU accumulation
    out_bf16 = conv_block_forward(x, weight, bias, gamma, beta, run_mean, run_var,
                                  z=Z, p=P, s=S, compute_dtype=jnp.bfloat16)
    out_bf16 = jax.block_until_ready(out_bf16)
    assert out_bf16.shape == (N, Cout, H, W), out_bf16.shape
    assert out_bf16.dtype == jnp.bfloat16
    diff = jnp.abs(out_bf16.astype(jnp.float32) - ref)
    assert jnp.allclose(out_bf16.astype(jnp.float32), ref, atol=5e-2, rtol=5e-2), \
        float(diff.max())

    print("KERNEL_OK")
</pallas_src>

<mosaic_0001>
module attributes {stable_mosaic.version = 11 : i64} {
  func.func @_conv_bn_lrelu_kernel(%arg0: i32, %arg1: i32, %arg2: memref<1x18x72xf32, #tpu.memory_space<vmem>>, %arg3: memref<3x72x128xf32, #tpu.memory_space<vmem>>, %arg4: memref<1x128xf32, #tpu.memory_space<vmem>>, %arg5: memref<1x8x128xf32, #tpu.memory_space<vmem>>) attributes {dimension_semantics = [#tpu.dimension_semantics<parallel>, #tpu.dimension_semantics<parallel>], iteration_bounds = array<i64: 2, 2>, scalar_prefetch = 0 : i64, scratch_operands = 0 : i64, tpu.core_type = #tpu.core_type<tc>, window_params = [{transform_indices = @transform_0, window_bounds = array<i64: 1, 18, 72>}, {pipeline_mode = #tpu.pipeline_mode<synchronous>, transform_indices = @transform_1, window_bounds = array<i64: 3, 72, 128>}, {pipeline_mode = #tpu.pipeline_mode<synchronous>, transform_indices = @transform_2, window_bounds = array<i64: 1, 128>}, {transform_indices = @transform_3, window_bounds = array<i64: 1, 8, 128>}]} {
    %c8_i32 = arith.constant 8 : i32
    %0 = arith.muli %arg1, %c8_i32 : i32
    %cst = arith.constant 0.000000e+00 : f32
    %1 = vector.broadcast %cst : f32 to vector<8x128xf32>
    %c0_i32 = arith.constant 0 : i32
    %2 = arith.addi %0, %c0_i32 : i32
    %c0 = arith.constant 0 : index
    %3 = arith.index_cast %2 : i32 to index
    %c0_0 = arith.constant 0 : index
    %4 = vector.load %arg2[%c0, %3, %c0_0] : memref<1x18x72xf32, #tpu.memory_space<vmem>>, vector<1x8x72xf32>
    %5 = vector.shape_cast %4 : vector<1x8x72xf32> to vector<8x72xf32>
    %c0_1 = arith.constant 0 : index
    %c0_2 = arith.constant 0 : index
    %c0_3 = arith.constant 0 : index
    %6 = vector.load %arg3[%c0_1, %c0_2, %c0_3] : memref<3x72x128xf32, #tpu.memory_space<vmem>>, vector<1x72x128xf32>
    %7 = vector.shape_cast %6 : vector<1x72x128xf32> to vector<72x128xf32>
    %cst_4 = arith.constant dense<0.000000e+00> : vector<8x128xf32>
    %8 = tpu.matmul %5, %7, %cst_4 {dimension_numbers = #tpu.dot_dimension_numbers<[1], [0], [0], [1], [0, 0, 1, 1], [], []>} : vector<8x72xf32>, vector<72x128xf32>, vector<8x128xf32> -> vector<8x128xf32>
    %9 = arith.addf %1, %8 : vector<8x128xf32>
    %c1_i32 = arith.constant 1 : i32
    %10 = arith.addi %0, %c1_i32 : i32
    %c0_5 = arith.constant 0 : index
    %11 = arith.index_cast %10 : i32 to index
    %c0_6 = arith.constant 0 : index
    %12 = vector.load %arg2[%c0_5, %11, %c0_6] : memref<1x18x72xf32, #tpu.memory_space<vmem>>, vector<1x8x72xf32>
    %13 = vector.shape_cast %12 : vector<1x8x72xf32> to vector<8x72xf32>
    %c1 = arith.constant 1 : index
    %c0_7 = arith.constant 0 : index
    %c0_8 = arith.constant 0 : index
    %14 = vector.load %arg3[%c1, %c0_7, %c0_8] : memref<3x72x128xf32, #tpu.memory_space<vmem>>, vector<1x72x128xf32>
    %15 = vector.shape_cast %14 : vector<1x72x128xf32> to vector<72x128xf32>
    %cst_9 = arith.constant dense<0.000000e+00> : vector<8x128xf32>
    %16 = tpu.matmul %13, %15, %cst_9 {dimension_numbers = #tpu.dot_dimension_numbers<[1], [0], [0], [1], [0, 0, 1, 1], [], []>} : vector<8x72xf32>, vector<72x128xf32>, vector<8x128xf32> -> vector<8x128xf32>
    %17 = arith.addf %9, %16 : vector<8x128xf32>
    %c2_i32 = arith.constant 2 : i32
    %18 = arith.addi %0, %c2_i32 : i32
    %c0_10 = arith.constant 0 : index
    %19 = arith.index_cast %18 : i32 to index
    %c0_11 = arith.constant 0 : index
    %20 = vector.load %arg2[%c0_10, %19, %c0_11] : memref<1x18x72xf32, #tpu.memory_space<vmem>>, vector<1x8x72xf32>
    %21 = vector.shape_cast %20 : vector<1x8x72xf32> to vector<8x72xf32>
    %c2 = arith.constant 2 : index
    %c0_12 = arith.constant 0 : index
    %c0_13 = arith.constant 0 : index
    %22 = vector.load %arg3[%c2, %c0_12, %c0_13] : memref<3x72x128xf32, #tpu.memory_space<vmem>>, vector<1x72x128xf32>
    %23 = vector.shape_cast %22 : vector<1x72x128xf32> to vector<72x128xf32>
    %cst_14 = arith.constant dense<0.000000e+00> : vector<8x128xf32>
    %24 = tpu.matmul %21, %23, %cst_14 {dimension_numbers = #tpu.dot_dimension_numbers<[1], [0], [0], [1], [0, 0, 1, 1], [], []>} : vector<8x72xf32>, vector<72x128xf32>, vector<8x128xf32> -> vector<8x128xf32>
    %25 = arith.addf %17, %24 : vector<8x128xf32>
    %c0_15 = arith.constant 0 : index
    %c0_16 = arith.constant 0 : index
    %26 = vector.load %arg4[%c0_15, %c0_16] : memref<1x128xf32, #tpu.memory_space<vmem>>, vector<1x128xf32>
    %27 = vector.broadcast %26 : vector<1x128xf32> to vector<8x128xf32>
    %28 = arith.addf %25, %27 : vector<8x128xf32>
    %cst_17 = arith.constant 0.000000e+00 : f32
    %29 = vector.broadcast %cst_17 : f32 to vector<8x128xf32>
    %30 = arith.cmpf oge, %28, %29 : vector<8x128xf32>
    %cst_18 = arith.constant 3.000000e-01 : f32
    %31 = vector.broadcast %cst_18 : f32 to vector<8x128xf32>
    %32 = arith.mulf %31, %28 : vector<8x128xf32>
    %33 = arith.select %30, %28, %32 : vector<8x128xi1>, vector<8x128xf32>
    %c0_19 = arith.constant 0 : index
    %c0_20 = arith.constant 0 : index
    %c0_21 = arith.constant 0 : index
    %34 = vector.load %arg5[%c0_19, %c0_20, %c0_21] : memref<1x8x128xf32, #tpu.memory_space<vmem>>, vector<1x8x128xf32>
    %35 = vector.shape_cast %34 : vector<1x8x128xf32> to vector<8x128xf32>
    %36 = vector.shape_cast %33 : vector<8x128xf32> to vector<1x8x128xf32>
    tpu.vector_store %arg5[%c0_19, %c0_20, %c0_21], %36 {strides = array<i32>} : memref<1x8x128xf32, #tpu.memory_space<vmem>>, vector<1x8x128xf32>,
    return
  }
  func.func @transform_0(%arg0: i32, %arg1: i32) -> (i32, i32, i32) {
    %c0_i32 = arith.constant 0 : i32
    %c0_i32_0 = arith.constant 0 : i32
    %c0_i32_1 = arith.constant 0 : i32
    return %arg0, %c0_i32, %c0_i32_0 : i32, i32, i32
  }
  func.func @transform_1(%arg0: i32, %arg1: i32) -> (i32, i32, i32) {
    %c0_i32 = arith.constant 0 : i32
    %c0_i32_0 = arith.constant 0 : i32
    %c0_i32_1 = arith.constant 0 : i32
    %c0_i32_2 = arith.constant 0 : i32
    return %c0_i32, %c0_i32_0, %c0_i32_1 : i32, i32, i32
  }
  func.func @transform_2(%arg0: i32, %arg1: i32) -> (i32, i32) {
    %c0_i32 = arith.constant 0 : i32
    %c0_i32_0 = arith.constant 0 : i32
    %c0_i32_1 = arith.constant 0 : i32
    return %c0_i32, %c0_i32_0 : i32, i32
  }
  func.func @transform_3(%arg0: i32, %arg1: i32) -> (i32, i32, i32) {
    %c0_i32 = arith.constant 0 : i32
    %c0_i32_0 = arith.constant 0 : i32
    return %arg0, %arg1, %c0_i32 : i32, i32, i32
  }
}

</mosaic_0001>

<llo_original>
// kernel: tile.8
$region0: #{tile.8}
  #allocation0 [shape = 's32[1]{0}', space=sflag, size = 0x4, scoped, tag = 'scoped memory for tile.8']
  %s0 = inlined_call_operand.vmem [shape: f32[8], index: 0, kind: input, shape index: {}]
  %s1 = inlined_call_operand.vmem [shape: f32[16,8], index: 1, kind: output, shape index: {}]
  // Predicated region
  $region2: #{tile.8} parent=0 // pred_check
    _
  $region3: #{tile.8} parent=0 // pred_check_branch
    %3 = sbr.rel (0) target = $region5
  $region4: #{tile.8} parent=0 // pred_region
    _
  $region5: #{tile.8} parent=0 // pred_fallthru
    _
  %v4 = vld [vmem:[%s0] ss:$0 sm:$0xff]
  %5 = vst [vmem:[%s1] sm:$0xff] %v4
  %s6 = scalar_lea.vmem %s1, 8
  %7 = vst [vmem:[%s6] sm:$0xff] %v4

// kernel: tile.9
$region0: #{tile.9}
  %s0 = inlined_call_operand.vmem [shape: f32[16,8], index: 0, kind: input, shape index: {}]
  %s1 = inlined_call_operand.vmem [shape: f32[1,128], index: 1, kind: output, shape index: {}]
  $region1: #{tile.9} parent=0
    #allocation0 [shape = 'u8[4096]{0}', space=vmem, size = 0x1000, scoped, tag = 'scoped mem for output reshape']
    %v2 = vld [vmem:[%s0] sm:$0x1]
    %vm3 = vcmask 64512
    %4 = vst.msk [vmem:[#allocation0] sm:$0x1] %vm3, %v2
    %s5 = scalar_lea.vmem %s0, 15
    %v6 = vld [vmem:[%s5] sm:$0x1]
    %7 = vrot.lane.b32.xlu0 %v6, 120
    %v8 = vpop.permute.xlu0 %7
    %vm9 = vcmask 1048512
    %10 = vst.msk [vmem:[#allocation0] sm:$0x1] %vm9, %v8
    %s11 = scalar_lea.vmem %s0, 14
    %v12 = vld [vmem:[%s11] sm:$0x1]
    %13 = vrot.lane.b32.xlu0 %v12, 112
    %v14 = vpop.permute.xlu0 %13
    %vm15 = vcmask 982912
    %16 = vst.msk [vmem:[#allocation0] sm:$0x1] %vm15, %v14
    %s17 = scalar_lea.vmem %s0, 13
    %v18 = vld [vmem:[%s17] sm:$0x1]
    %19 = vrot.lane.b32.xlu0 %v18, 104
    %v20 = vpop.permute.xlu0 %19
    %vm21 = vcmask 917312
    %22 = vst.msk [vmem:[#allocation0] sm:$0x1] %vm21, %v20
    %s23 = scalar_lea.vmem %s0, 12
    %v24 = vld [vmem:[%s23] sm:$0x1]
    %25 = vrot.lane.b32.xlu0 %v24, 96
    %v26 = vpop.permute.xlu0 %25
    %vm27 = vcmask 851712
    %28 = vst.msk [vmem:[#allocation0] sm:$0x1] %vm27, %v26
    %s29 = scalar_lea.vmem %s0, 11
    %v30 = vld [vmem:[%s29] sm:$0x1]
    %31 = vrot.lane.b32.xlu0 %v30, 88
    %v32 = vpop.permute.xlu0 %31
    %vm33 = vcmask 786112
    %34 = vst.msk [vmem:[#allocation0] sm:$0x1] %vm33, %v32
    %s35 = scalar_lea.vmem %s0, 10
    %v36 = vld [vmem:[%s35] sm:$0x1]
    %37 = vrot.lane.b32.xlu0 %v36, 80
    %v38 = vpop.permute.xlu0 %37
    %vm39 = vcmask 720512
    %40 = vst.msk [vmem:[#allocation0] sm:$0x1] %vm39, %v38
    %s41 = scalar_lea.vmem %s0, 9
    %v42 = vld [vmem:[%s41] sm:$0x1]
    %43 = vrot.lane.b32.xlu0 %v42, 72
    %v44 = vpop.permute.xlu0 %43
    %vm45 = vcmask 654912
    %46 = vst.msk [vmem:[#allocation0] sm:$0x1] %vm45, %v44
    %s47 = scalar_lea.vmem %s0, 8
    %v48 = vld [vmem:[%s47] sm:$0x1]
    %49 = vrot.lane.b32.xlu0 %v48, 64
    %v50 = vpop.permute.xlu0 %49
    %vm51 = vcmask 589312
    %52 = vst.msk [vmem:[#allocation0] sm:$0x1] %vm51, %v50
    %s53 = scalar_lea.vmem %s0, 7
    %v54 = vld [vmem:[%s53] sm:$0x1]
    %55 = vrot.lane.b32.xlu0 %v54, 56
    %v56 = vpop.permute.xlu0 %55
    %vm57 = vcmask 523712
    %58 = vst.msk [vmem:[#allocation0] sm:$0x1] %vm57, %v56
    %s59 = scalar_lea.vmem %s0, 6
    %v60 = vld [vmem:[%s59] sm:$0x1]
    %61 = vrot.lane.b32.xlu0 %v60, 48
    %v62 = vpop.permute.xlu0 %61
    %vm63 = vcmask 458112
    %64 = vst.msk [vmem:[#allocation0] sm:$0x1] %vm63, %v62
    %s65 = scalar_lea.vmem %s0, 5
    %v66 = vld [vmem:[%s65] sm:$0x1]
    %67 = vrot.lane.b32.xlu0 %v66, 40
    %v68 = vpop.permute.xlu0 %67
    %vm69 = vcmask 392512
    %70 = vst.msk [vmem:[#allocation0] sm:$0x1] %vm69, %v68
    %s71 = scalar_lea.vmem %s0, 4
    %v72 = vld [vmem:[%s71] sm:$0x1]
    %73 = vrot.lane.b32.xlu0 %v72, 32
    %v74 = vpop.permute.xlu0 %73
    %vm75 = vcmask 326912
    %76 = vst.msk [vmem:[#allocation0] sm:$0x1] %vm75, %v74
    %s77 = scalar_lea.vmem %s0, 3
    %v78 = vld [vmem:[%s77] sm:$0x1]
    %79 = vrot.lane.b32.xlu0 %v78, 24
    %v80 = vpop.permute.xlu0 %79
    %vm81 = vcmask 261312
    %82 = vst.msk [vmem:[#allocation0] sm:$0x1] %vm81, %v80
    %s83 = scalar_lea.vmem %s0, 2
    %v84 = vld [vmem:[%s83] sm:$0x1]
    %85 = vrot.lane.b32.xlu0 %v84, 16
    %v86 = vpop.permute.xlu0 %85
    %vm87 = vcmask 195712
    %88 = vst.msk [vmem:[#allocation0] sm:$0x1] %vm87, %v86
    %s89 = scalar_lea.vmem %s0, 1
    %v90 = vld [vmem:[%s89] sm:$0x1]
    %91 = vrot.lane.b32.xlu0 %v90, 8
    %v92 = vpop.permute.xlu0 %91
    %vm93 = vcmask 130112
    %94 = vst.msk [vmem:[#allocation0] sm:$0x1] %vm93, %v92
    %s96 = sshllo.u32 0, 1
    %v98 = vld [vmem:[#allocation0] sm:%s96]
    %s99 = sshllo.u32 0, 1
    %100 = vst [vmem:[%s1] sm:%s99] %v98

// kernel: conv_block_forward.1
$region0: #{conv_block_forward.1}
  #allocation0 [shape = 'u32[]', space=smem, size = 0x4, offset = 0x4, fixed_abs, tag = 'smem constant byte address 0x4 - core index']
  #allocation1 [shape = 'u32[144,128]{1,0:T(1,128)}', space=vmem, size = 0x12000, scoped, tag = 'internal scratch']
  %s0 = inlined_call_operand.vmem [shape: f32[2,18,72], index: 0, kind: input, shape index: {}]
  %s1 = inlined_call_operand.vmem [shape: f32[3,72,128], index: 1, kind: input, shape index: {}]
  %s2 = inlined_call_operand.vmem [shape: f32[1,128], index: 2, kind: input, shape index: {}]
  %s3 = inlined_call_operand.vmem [shape: f32[2,16,128], index: 3, kind: output, shape index: {}]
  %s4 = sld [smem:[#allocation0]]
  $region45: #{conv_block_forward.1} parent=0
    _
  %s6 = ssub.s32 1, %s4
  %s7 = scalar_select 0, %s6, %s4
  loop: start=0, step=1, limit=6
  $region2: #{conv_block_forward.1} parent=0 // loop_pre_header
    _
  $region3: #{conv_block_forward.1} parent=0 // loop_header
    %s9 = sphi 0, %s13
    %p10 = scmp.ge.s32.totalorder %s9, 6
    %s16 = sphi 0, %s28
    %s17 = sphi 0, %s24
    %s18 = sphi 0, %s16
    %s19 = sphi 0, %s17
    %s20 = sphi 0, %s18
    %s21 = sphi 0, %s19
    %s31 = sphi 0, %s33
    %s34 = sphi 0, %s31
    %s35 = sphi 0, %s34
    %s51 = sphi 0, %s35
    %s55 = sphi 0, %s55
    %s57 = sphi 0, %s55
    %s58 = sphi 0, %s57
    %s72 = sphi 0, %s58
    %s76 = sphi 0, %s76
    %s78 = sphi 0, %s76
    %s79 = sphi 0, %s78
    %s93 = sphi 0, %s79
    %s101 = sphi 0, %s103
    %s104 = sphi 0, %s101
    %s105 = sphi 0, %s104
    %s121 = sphi 0, %s105
  $region4: #{conv_block_forward.1} parent=0 // loop_header_branch
    %12 = sbr.rel (%p10) target = $region8
  $region5: #{conv_block_forward.1} parent=0 // loop_body
    %s14 = ssub.s32 %s9, 1
    %s15 = ssub.s32 %s9, 2
    %s22 = sadd.s32 1, %s17
    %p23 = scmp.ge.s32.totalorder %s22, 2
    %s24 = scalar_select %p23, 0, %s22
    %s25 = sadd.s32 1, %s16
    %s26 = scalar_select %p23, %s25, %s16
    %p27 = scmp.ge.s32.totalorder %s26, 2
    %s28 = scalar_select %p27, 0, %s26
    %s29 = ssub.s32 %s16, %s28
    %p30 = scmp.eq.s32.totalorder %s29, 0
    %s32 = sadd.s32 %s31, 1
    %s33 = scalar_select %p30, %s31, %s32
    %p36 = pneg %p30
    %p37 = scmp.eq.s32.totalorder %s9, 3
    %p38 = por %p36, %p37
    %p39 = scmp.ne.s32.totalorder %s31, %s34
    %p40 = scmp.eq.s32.totalorder %s9, 0
    %p41 = por %p39, %p40
    %p42 = scmp.ne.s32.totalorder %s31, %s34
    %p43 = scmp.eq.s32.totalorder %s14, 3
    %p44 = por %p42, %p43
    %p45 = scmp.ne.s32.totalorder %s34, %s35
    %p46 = scmp.eq.s32.totalorder %s14, 0
    %p47 = por %p45, %p46
    %p48 = scmp.ne.s32.totalorder %s34, %s35
    %p49 = scmp.eq.s32.totalorder %s15, 3
    %p50 = por %p48, %p49
    %p52 = scmp.ne.s32.totalorder %s35, %s51
    %p53 = scmp.eq.s32.totalorder %s15, 0
    %p54 = por %p52, %p53
    %s56 = sadd.s32 %s55, 1
    %p59 = scmp.eq.s32.totalorder %s9, 3
    %p60 = scmp.ne.s32.totalorder %s55, %s57
    %p61 = scmp.eq.s32.totalorder %s9, 0
    %p62 = por %p60, %p61
    %p63 = scmp.ne.s32.totalorder %s55, %s57
    %p64 = scmp.eq.s32.totalorder %s14, 3
    %p65 = por %p63, %p64
    %p66 = scmp.ne.s32.totalorder %s57, %s58
    %p67 = scmp.eq.s32.totalorder %s14, 0
    %p68 = por %p66, %p67
    %p69 = scmp.ne.s32.totalorder %s57, %s58
    %p70 = scmp.eq.s32.totalorder %s15, 3
    %p71 = por %p69, %p70
    %p73 = scmp.ne.s32.totalorder %s58, %s72
    %p74 = scmp.eq.s32.totalorder %s15, 0
    %p75 = por %p73, %p74
    %s77 = sadd.s32 %s76, 1
    %p80 = scmp.eq.s32.totalorder %s9, 3
    %p81 = scmp.ne.s32.totalorder %s76, %s78
    %p82 = scmp.eq.s32.totalorder %s9, 0
    %p83 = por %p81, %p82
    %p84 = scmp.ne.s32.totalorder %s76, %s78
    %p85 = scmp.eq.s32.totalorder %s14, 3
    %p86 = por %p84, %p85
    %p87 = scmp.ne.s32.totalorder %s78, %s79
    %p88 = scmp.eq.s32.totalorder %s14, 0
    %p89 = por %p87, %p88
    %p90 = scmp.ne.s32.totalorder %s78, %s79
    %p91 = scmp.eq.s32.totalorder %s15, 3
    %p92 = por %p90, %p91
    %p94 = scmp.ne.s32.totalorder %s79, %s93
    %p95 = scmp.eq.s32.totalorder %s15, 0
    %p96 = por %p94, %p95
    %s97 = ssub.s32 %s16, %s28
    %s98 = ssub.s32 %s17, %s24
    %s99 = sor.u32 %s97, %s98
    %p100 = scmp.eq.s32.totalorder %s99, 0
    %s102 = sadd.s32 %s101, 1
    %s103 = scalar_select %p100, %s101, %s102
    %p106 = pneg %p100
    %p107 = scmp.eq.s32.totalorder %s9, 3
    %p108 = por %p106, %p107
    %p109 = scmp.ne.s32.totalorder %s101, %s104
    %p110 = scmp.eq.s32.totalorder %s9, 0
    %p111 = por %p109, %p110
    %p112 = scmp.ne.s32.totalorder %s101, %s104
    %p113 = scmp.eq.s32.totalorder %s14, 3
    %p114 = por %p112, %p113
    %p115 = scmp.ne.s32.totalorder %s104, %s105
    %p116 = scmp.eq.s32.totalorder %s14, 0
    %p117 = por %p115, %p116
    %p118 = scmp.ne.s32.totalorder %s104, %s105
    %p119 = scmp.eq.s32.totalorder %s15, 3
    %p120 = por %p118, %p119
    %p122 = scmp.ne.s32.totalorder %s105, %s121
    %p123 = scmp.eq.s32.totalorder %s15, 0
    %p124 = por %p122, %p123
    %p125 = scmp.le.s32.totalorder 1, %s9
    %p126 = scmp.lt.s32.totalorder %s9, 5
    %p127 = pnand %p125, %p126
    %p128 = pneg %p127
    // Predicated region
    $region9: #{conv_block_forward.1} parent=5 // pred_check
      _
    $region10: #{conv_block_forward.1} parent=5 // pred_check_branch
      %130 = sbr.rel (%p127) target = $region12
    $region11: #{conv_block_forward.1} parent=5 // pred_region
      %s131 = ssub.s32 %s9, 1
      // Predicated region
      $region13: #{conv_block_forward.1} parent=11 // pred_check
        %p132 = pneg %p68
      $region14: #{conv_block_forward.1} parent=11 // pred_check_branch
        %134 = sbr.rel (%p132) target = $region16
      $region15: #{conv_block_forward.1} parent=11 // pred_region
        _
      $region16: #{conv_block_forward.1} parent=11 // pred_fallthru
        _
      // Predicated region
      $region17: #{conv_block_forward.1} parent=11 // pred_check
        %p135 = pneg %p89
      $region18: #{conv_block_forward.1} parent=11 // pred_check_branch
        %137 = sbr.rel (%p135) target = $region20
      $region19: #{conv_block_forward.1} parent=11 // pred_region
        _
      $region20: #{conv_block_forward.1} parent=11 // pred_fallthru
        _
    $region12: #{conv_block_forward.1} parent=5 // pred_fallthru
      _
    %p138 = scmp.lt.s32.totalorder %s9, 4
    // Predicated region
    $region21: #{conv_block_forward.1} parent=5 // pred_check
      %p139 = pneg %p138
    $region22: #{conv_block_forward.1} parent=5 // pred_check_branch
      %141 = sbr.rel (%p139) target = $region24
    $region23: #{conv_block_forward.1} parent=5 // pred_region
      // Predicated region
      $region25: #{conv_block_forward.1} parent=23 // pred_check
        %p142 = pneg %p41
      $region26: #{conv_block_forward.1} parent=23 // pred_check_branch
        %144 = sbr.rel (%p142) target = $region28
      $region27: #{conv_block_forward.1} parent=23 // pred_region
        %p145 = scmp.lt.s32.totalorder %s16, 1
        %s146 = scalar_select %p145, %s16, 1
        %s147 = smul.addr %s146, 3
        %s148 = smul.addr %s147, 8
        %s149 = scalar_lea.vmem %s0, %s148
      $region28: #{conv_block_forward.1} parent=23 // pred_fallthru
        _
    $region24: #{conv_block_forward.1} parent=5 // pred_fallthru
      _
    %p150 = scmp.le.s32.totalorder 1, %s9
    %p151 = scmp.lt.s32.totalorder %s9, 5
    %p152 = pnand %p150, %p151
    %p153 = pneg %p152
    // Predicated region
    $region29: #{conv_block_forward.1} parent=5 // pred_check
      _
    $region30: #{conv_block_forward.1} parent=5 // pred_check_branch
      %155 = sbr.rel (%p152) target = $region32
    $region31: #{conv_block_forward.1} parent=5 // pred_region
      %s156 = ssub.s32 %s9, 1
      %p157 = scmp.lt.s32.totalorder %s18, 1
      %s158 = scalar_select %p157, %s18, 1
      %s159 = smul.addr %s158, 3
      %s160 = smul.addr %s159, 8
      %s161 = scalar_lea.vmem %s0, %s160
      %p162 = pneg %p47
      %p163 = pneg %p44
      %p164 = pneg %p68
      %p165 = pneg %p65
      %p166 = pneg %p89
      %p167 = pneg %p86
      %p168 = pneg %p117
      %p169 = pneg %p114
      %p170 = scmp.lt.s32.totalorder %s18, 1
      %s171 = scalar_select %p170, %s18, 1
      %p172 = scmp.lt.s32.totalorder %s19, 1
      %s173 = scalar_select %p172, %s19, 1
      %s174 = smul.addr %s171, 2
      %s175 = sadd.s32 %s173, %s174
      %s176 = smul.addr %s175, 8
      %s177 = scalar_lea.vmem %s3, %s176
      %p178 = scmp.lt.s32.totalorder %s18, 1
      %s179 = scalar_select %p178, %s18, 1
      %s180 = smul.addr %s179, 3
      %s181 = smul.addr %s180, 8
      %s182 = scalar_lea.vmem %s0, %s181
      %p183 = scmp.lt.s32.totalorder %s18, 1
      %s184 = scalar_select %p183, %s18, 1
      %p185 = scmp.lt.s32.totalorder %s19, 1
      %s186 = scalar_select %p185, %s19, 1
      %s187 = smul.addr %s184, 2
      %s188 = sadd.s32 %s186, %s187
      %s189 = smul.addr %s188, 8
      %s190 = scalar_lea.vmem %s3, %s189
      %s191 = smul.u32 %s19, 8
      %s192 = scalar_lea.vmem %s182, %s191
      %v193 = vld [vmem:[%s192] sm:$0xff]
      %v194 = vld [vmem:[%s1] sm:$0xff]
      %v195 = vld [vmem:[%s1 + $0x8] sm:$0xff]
      %v196 = vld [vmem:[%s1 + $0x10] sm:$0xff]
      %v197 = vld [vmem:[%s1 + $0x18] sm:$0xff]
      %v198 = vld [vmem:[%s1 + $0x20] sm:$0xff]
      %v199 = vld [vmem:[%s1 + $0x28] sm:$0xff]
      %v200 = vld [vmem:[%s1 + $0x30] sm:$0xff]
      %v201 = vld [vmem:[%s1 + $0x38] sm:$0xff]
      %v202 = vld [vmem:[%s1 + $0x40] sm:$0xff]
      %s203 = sadd.s32 %s191, 1
      %s204 = scalar_lea.vmem %s182, %s203
      %v205 = vld [vmem:[%s204] sm:$0xff]
      %s206 = scalar_lea.vmem %s1, 72
      %v207 = vld [vmem:[%s206] sm:$0xff]
      %v208 = vld [vmem:[%s206 + $0x8] sm:$0xff]
      %v209 = vld [vmem:[%s206 + $0x10] sm:$0xff]
      %v210 = vld [vmem:[%s206 + $0x18] sm:$0xff]
      %v211 = vld [vmem:[%s206 + $0x20] sm:$0xff]
      %v212 = vld [vmem:[%s206 + $0x28] sm:$0xff]
      %v213 = vld [vmem:[%s206 + $0x30] sm:$0xff]
      %v214 = vld [vmem:[%s206 + $0x38] sm:$0xff]
      %v215 = vld [vmem:[%s206 + $0x40] sm:$0xff]
      %vm216 = vcmask 588800
      %v218 = vsel %vm216, %v205, 0
      %220 = vmatprep.subr.mxu0 0.0
      %221 = vmatpush1.msra.mxu0 %v207
      %222 = vmatprep.subr.mxu0 0.0
      %223 = vmatpush1.msra.mxu0 %v208
      %224 = vmatprep.subr.mxu0 0.0
      %225 = vmatpush1.msra.mxu0 %v209
      %226 = vmatprep.subr.mxu0 0.0
      %227 = vmatpush1.msra.mxu0 %v210
      %228 = vmatprep.subr.mxu0 0.0
      %229 = vmatpush1.msra.mxu0 %v211
      %230 = vmatprep.subr.mxu0 0.0
      %231 = vmatpush1.msra.mxu0 %v212
      %232 = vmatprep.subr.mxu0 0.0
      %233 = vmatpush1.msra.mxu0 %v213
      %234 = vmatprep.subr.mxu0 0.0
      %235 = vmatpush1.msra.mxu0 %v214
      %236 = vmatprep.subr.mxu0 0.0
      %237 = vmatpush1.msra.mxu0 %v215
      %238 = vmatprep.subr.mxu0 0.0
      %239 = vmatpush1.msra.mxu0 0.0
      %240 = vmatprep.subr.mxu0 0.0
      %241 = vmatpush1.msra.mxu0 0.0
      %242 = vmatprep.subr.mxu0 0.0
      %243 = vmatpush1.msra.mxu0 0.0
      %244 = vmatprep.subr.mxu0 0.0
      %245 = vmatpush1.msra.mxu0 0.0
      %246 = vmatprep.subr.mxu0 0.0
      %247 = vmatpush1.msra.mxu0 0.0
      %248 = vmatprep.subr.mxu0 0.0
      %249 = vmatpush1.msra.mxu0 0.0
      %250 = vmatprep.subr.mxu0 0.0
      %251 = vmatpush1.msra.mxu0 0.0
      %252 = vmatprep.subr.mxu0 0.0
      %253 = vmatpush1.msra.mxu0 0.0
      %254 = vmatprep.subr.mxu0 0.0
      %255 = vmatpush1.msra.mxu0 0.0
      %256 = vmatprep.subr.mxu0 0.0
      %257 = vmatpush1.msra.mxu0 0.0
      %258 = vmatprep.subr.mxu0 0.0
      %259 = vmatpush1.msra.mxu0 0.0
      %260 = vmatprep.subr.mxu0 0.0
      %261 = vmatpush1.msra.mxu0 0.0
      %262 = vmatprep.subr.mxu0 0.0
      %263 = vmatpush1.msra.mxu0 0.0
      %264 = vmatprep.subr.mxu0 0.0
      %265 = vmatpush1.msra.mxu0 0.0
      %266 = vmatprep.subr.mxu0 0.0
      %267 = vmatpush1.msra.mxu0 0.0
      %268 = vmatprep.subr.mxu0 0.0
      %269 = vmatpush1.msra.mxu0 0.0
      %270 = vmatprep.subr.mxu0 0.0
      %271 = vmatpush1.msra.mxu0 0.0
      %272 = vmatprep.subr.mxu0 0.0
      %273 = vmatpush1.msra.mxu0 0.0
      %274 = vmatprep.subr.mxu0 0.0
      %275 = vmatpush1.msra.mxu0 0.0
      %276 = vmatprep.subr.mxu0 0.0
      %277 = vmatpush1.msra.mxu0 0.0
      %278 = vmatprep.subr.mxu0 0.0
      %279 = vmatpush1.msra.mxu0 0.0
      %280 = vmatprep.subr.mxu0 0.0
      %281 = vmatpush1.msra.mxu0 0.0
      %282 = vmatprep.subr.mxu0 0.0
      %283 = vmatpush1.msra.mxu0 0.0
      %284 = vmatprep.mubr.f32.mxu0 0.0
      %285 = vmatmul.mubr.f32.gmra.mrb[0].mxu0 %v218
      %v286 = vpop.f32.mrb[0].mxu0
      %v287 = vadd.f32 0.0, %v286
      %v288 = vpop.f32.mrb[0].mxu0
      %289 = vdwg.mxu0
      %v291 = vsel %vm216, %v193, 0
      %293 = vmatprep.subr.mxu0 0.0
      %294 = vmatpush1.msra.mxu0 %v194
      %295 = vmatprep.subr.mxu0 0.0
      %296 = vmatpush1.msra.mxu0 %v195
      %297 = vmatprep.subr.mxu0 0.0
      %298 = vmatpush1.msra.mxu0 %v196
      %299 = vmatprep.subr.mxu0 0.0
      %300 = vmatpush1.msra.mxu0 %v197
      %301 = vmatprep.subr.mxu0 0.0
      %302 = vmatpush1.msra.mxu0 %v198
      %303 = vmatprep.subr.mxu0 0.0
      %304 = vmatpush1.msra.mxu0 %v199
      %305 = vmatprep.subr.mxu0 0.0
      %306 = vmatpush1.msra.mxu0 %v200
      %307 = vmatprep.subr.mxu0 0.0
      %308 = vmatpush1.msra.mxu0 %v201
      %309 = vmatprep.subr.mxu0 0.0
      %310 = vmatpush1.msra.mxu0 %v202
      %311 = vmatprep.subr.mxu0 0.0
      %312 = vmatpush1.msra.mxu0 0.0
      %313 = vmatprep.subr.mxu0 0.0
      %314 = vmatpush1.msra.mxu0 0.0
      %315 = vmatprep.subr.mxu0 0.0
      %316 = vmatpush1.msra.mxu0 0.0
      %317 = vmatprep.subr.mxu0 0.0
      %318 = vmatpush1.msra.mxu0 0.0
      %319 = vmatprep.subr.mxu0 0.0
      %320 = vmatpush1.msra.mxu0 0.0
      %321 = vmatprep.subr.mxu0 0.0
      %322 = vmatpush1.msra.mxu0 0.0
      %323 = vmatprep.subr.mxu0 0.0
      %324 = vmatpush1.msra.mxu0 0.0
      %325 = vmatprep.subr.mxu0 0.0
      %326 = vmatpush1.msra.mxu0 0.0
      %327 = vmatprep.subr.mxu0 0.0
      %328 = vmatpush1.msra.mxu0 0.0
      %329 = vmatprep.subr.mxu0 0.0
      %330 = vmatpush1.msra.mxu0 0.0
      %331 = vmatprep.subr.mxu0 0.0
      %332 = vmatpush1.msra.mxu0 0.0
      %333 = vmatprep.subr.mxu0 0.0
      %334 = vmatpush1.msra.mxu0 0.0
      %335 = vmatprep.subr.mxu0 0.0
      %336 = vmatpush1.msra.mxu0 0.0
      %337 = vmatprep.subr.mxu0 0.0
      %338 = vmatpush1.msra.mxu0 0.0
      %339 = vmatprep.subr.mxu0 0.0
      %340 = vmatpush1.msra.mxu0 0.0
      %341 = vmatprep.subr.mxu0 0.0
      %342 = vmatpush1.msra.mxu0 0.0
      %343 = vmatprep.subr.mxu0 0.0
      %344 = vmatpush1.msra.mxu0 0.0
      %345 = vmatprep.subr.mxu0 0.0
      %346 = vmatpush1.msra.mxu0 0.0
      %347 = vmatprep.subr.mxu0 0.0
      %348 = vmatpush1.msra.mxu0 0.0
      %349 = vmatprep.subr.mxu0 0.0
      %350 = vmatpush1.msra.mxu0 0.0
      %351 = vmatprep.subr.mxu0 0.0
      %352 = vmatpush1.msra.mxu0 0.0
      %353 = vmatprep.subr.mxu0 0.0
      %354 = vmatpush1.msra.mxu0 0.0
      %355 = vmatprep.subr.mxu0 0.0
      %356 = vmatpush1.msra.mxu0 0.0
      %357 = vmatprep.mubr.f32.mxu0 0.0
      %358 = vmatmul.mubr.f32.gmra.mrb[0].mxu0 %v291
      %v359 = vpop.f32.mrb[0].mxu0
      %v360 = vadd.f32 %v287, %v359
      %v361 = vpop.f32.mrb[0].mxu0
      %362 = vdwg.mxu0
      %s363 = sadd.s32 %s191, 2
      %s364 = scalar_lea.vmem %s182, %s363
      %v365 = vld [vmem:[%s364] sm:$0xff]
      %s366 = scalar_lea.vmem %s1, 144
      %v367 = vld [vmem:[%s366] sm:$0xff]
      %v368 = vld [vmem:[%s366 + $0x8] sm:$0xff]
      %v369 = vld [vmem:[%s366 + $0x10] sm:$0xff]
      %v370 = vld [vmem:[%s366 + $0x18] sm:$0xff]
      %v371 = vld [vmem:[%s366 + $0x20] sm:$0xff]
      %v372 = vld [vmem:[%s366 + $0x28] sm:$0xff]
      %v373 = vld [vmem:[%s366 + $0x30] sm:$0xff]
      %v374 = vld [vmem:[%s366 + $0x38] sm:$0xff]
      %v375 = vld [vmem:[%s366 + $0x40] sm:$0xff]
      %v377 = vsel %vm216, %v365, 0
      %379 = vmatprep.subr.mxu0 0.0
      %380 = vmatpush1.msra.mxu0 %v367
      %381 = vmatprep.subr.mxu0 0.0
      %382 = vmatpush1.msra.mxu0 %v368
      %383 = vmatprep.subr.mxu0 0.0
      %384 = vmatpush1.msra.mxu0 %v369
      %385 = vmatprep.subr.mxu0 0.0
      %386 = vmatpush1.msra.mxu0 %v370
      %387 = vmatprep.subr.mxu0 0.0
      %388 = vmatpush1.msra.mxu0 %v371
      %389 = vmatprep.subr.mxu0 0.0
      %390 = vmatpush1.msra.mxu0 %v372
      %391 = vmatprep.subr.mxu0 0.0
      %392 = vmatpush1.msra.mxu0 %v373
      %393 = vmatprep.subr.mxu0 0.0
      %394 = vmatpush1.msra.mxu0 %v374
      %395 = vmatprep.subr.mxu0 0.0
      %396 = vmatpush1.msra.mxu0 %v375
      %397 = vmatprep.subr.mxu0 0.0
      %398 = vmatpush1.msra.mxu0 0.0
      %399 = vmatprep.subr.mxu0 0.0
      %400 = vmatpush1.msra.mxu0 0.0
      %401 = vmatprep.subr.mxu0 0.0
      %402 = vmatpush1.msra.mxu0 0.0
      %403 = vmatprep.subr.mxu0 0.0
      %404 = vmatpush1.msra.mxu0 0.0
      %405 = vmatprep.subr.mxu0 0.0
      %406 = vmatpush1.msra.mxu0 0.0
      %407 = vmatprep.subr.mxu0 0.0
      %408 = vmatpush1.msra.mxu0 0.0
      %409 = vmatprep.subr.mxu0 0.0
      %410 = vmatpush1.msra.mxu0 0.0
      %411 = vmatprep.subr.mxu0 0.0
      %412 = vmatpush1.msra.mxu0 0.0
      %413 = vmatprep.subr.mxu0 0.0
      %414 = vmatpush1.msra.mxu0 0.0
      %415 = vmatprep.subr.mxu0 0.0
      %416 = vmatpush1.msra.mxu0 0.0
      %417 = vmatprep.subr.mxu0 0.0
      %418 = vmatpush1.msra.mxu0 0.0
      %419 = vmatprep.subr.mxu0 0.0
      %420 = vmatpush1.msra.mxu0 0.0
      %421 = vmatprep.subr.mxu0 0.0
      %422 = vmatpush1.msra.mxu0 0.0
      %423 = vmatprep.subr.mxu0 0.0
      %424 = vmatpush1.msra.mxu0 0.0
      %425 = vmatprep.subr.mxu0 0.0
      %426 = vmatpush1.msra.mxu0 0.0
      %427 = vmatprep.subr.mxu0 0.0
      %428 = vmatpush1.msra.mxu0 0.0
      %429 = vmatprep.subr.mxu0 0.0
      %430 = vmatpush1.msra.mxu0 0.0
      %431 = vmatprep.subr.mxu0 0.0
      %432 = vmatpush1.msra.mxu0 0.0
      %433 = vmatprep.subr.mxu0 0.0
      %434 = vmatpush1.msra.mxu0 0.0
      %435 = vmatprep.subr.mxu0 0.0
      %436 = vmatpush1.msra.mxu0 0.0
      %437 = vmatprep.subr.mxu0 0.0
      %438 = vmatpush1.msra.mxu0 0.0
      %439 = vmatprep.subr.mxu0 0.0
      %440 = vmatpush1.msra.mxu0 0.0
      %441 = vmatprep.subr.mxu0 0.0
      %442 = vmatpush1.msra.mxu0 0.0
      %443 = vmatprep.mubr.f32.mxu0 0.0
      %444 = vmatmul.mubr.f32.gmra.mrb[0].mxu0 %v377
      %v445 = vpop.f32.mrb[0].mxu0
      %v446 = vadd.f32 0.0, %v445
      %v447 = vpop.f32.mrb[0].mxu0
      %448 = vdwg.mxu0
      %v449 = vadd.f32 %v360, %v446
      %v450 = vld [vmem:[%s2] sm:$0x1]
      %v452 = vlaneseq
      %v453 = vshrl.u32 %v452, 7
      %v454 = vsub.s32 0, %v453
      %v455 = vrot.slane %v450, %v454
      %v457 = vadd.f32 %v449, %v455
      %vm458 = vcmp.ge.f32.partialorder %v457, 0.0
      %v459 = vmul.f32 %v457, 0.3
      %v460 = vsel %vm458, %v457, %v459
      %461 = vst [vmem:[%s190] sm:$0xff] %v460
      %p462 = scmp.lt.s32.totalorder %s18, 1
      %s463 = scalar_select %p462, %s18, 1
      %p464 = scmp.lt.s32.totalorder %s19, 1
      %s465 = scalar_select %p464, %s19, 1
      %s466 = smul.addr %s463, 2
      %s467 = sadd.s32 %s465, %s466
      %s468 = smul.addr %s467, 8
      %s469 = scalar_lea.vmem %s3, %s468
      // Predicated region
      $region33: #{conv_block_forward.1} parent=31 // pred_check
        %p470 = pneg %p114
      $region34: #{conv_block_forward.1} parent=31 // pred_check_branch
        %472 = sbr.rel (%p470) target = $region36
      $region35: #{conv_block_forward.1} parent=31 // pred_region
        _
      $region36: #{conv_block_forward.1} parent=31 // pred_fallthru
        _
    $region32: #{conv_block_forward.1} parent=5 // pred_fallthru
      _
    %p473 = scmp.le.s32.totalorder 2, %s9
    // Predicated region
    $region37: #{conv_block_forward.1} parent=5 // pred_check
      %p474 = pneg %p473
    $region38: #{conv_block_forward.1} parent=5 // pred_check_branch
      %476 = sbr.rel (%p474) target = $region40
    $region39: #{conv_block_forward.1} parent=5 // pred_region
      %s477 = ssub.s32 %s9, 2
      // Predicated region
      $region41: #{conv_block_forward.1} parent=39 // pred_check
        %p478 = pneg %p120
      $region42: #{conv_block_forward.1} parent=39 // pred_check_branch
        %480 = sbr.rel (%p478) target = $region44
      $region43: #{conv_block_forward.1} parent=39 // pred_region
        %p481 = scmp.lt.s32.totalorder %s20, 1
        %s482 = scalar_select %p481, %s20, 1
        %p483 = scmp.lt.s32.totalorder %s21, 1
        %s484 = scalar_select %p483, %s21, 1
        %s485 = smul.addr %s482, 2
        %s486 = sadd.s32 %s484, %s485
        %s487 = smul.addr %s486, 8
        %s488 = scalar_lea.vmem %s3, %s487
      $region44: #{conv_block_forward.1} parent=39 // pred_fallthru
        _
    $region40: #{conv_block_forward.1} parent=5 // pred_fallthru
      _
  $region6: #{conv_block_forward.1} parent=0 // loop_footer
    %s13 = sadd.s32 1, %s9
  $region7: #{conv_block_forward.1} parent=0 // loop_footer_branch
    %8 = sbr.rel target = $region3
  $region8: #{conv_block_forward.1} parent=0 // loop_exit
    _

</llo_original>
